<compile_context>
chip_gen: v7x
topology: tpu7x:2x2x1
jax: 0.10.0
libtpu: 0.0.40
codegen_flags: <defaults>
</compile_context>

<pallas_src>
import jax
import jax.numpy as jnp
from jax.experimental import pallas as pl
from jax.experimental.pallas import tpu as pltpu


_INV_SQRT2 = 0.7071067811865476


def _gelu_exact(x):
    # GELU(approximate='none'): 0.5 * x * (1 + erf(x / sqrt(2))), computed in f32.
    return 0.5 * x * (1.0 + jax.lax.erf(x * _INV_SQRT2))


def mlp_kernel(x_ref, w_up_ref, b_up_ref, w_down_ref, b_down_ref, o_ref, acc_ref):
    # x_ref:      (tm, D)
    # w_up_ref:   (D, th)      b_up_ref:   (1, th)
    # w_down_ref: (th, D)      b_down_ref: (1, D)
    # o_ref:      (tm, D)      acc_ref:    (tm, D) f32 scratch (resident over H axis)
    k = pl.program_id(1)

    @pl.when(k == 0)
    def _():
        acc_ref[...] = jnp.zeros_like(acc_ref)

    # Partial up-projection on this H slab: cast x to the weight dtype so the MXU runs
    # a native (e.g. bf16 x bf16 -> f32) matmul rather than a mixed-dtype f32 one.
    h = jnp.dot(x_ref[...].astype(w_up_ref.dtype), w_up_ref[...],
                preferred_element_type=jnp.float32)
    h = h + b_up_ref[...].astype(jnp.float32)

    # Exact GELU (erf) on the (tm, th) partial.
    h = _gelu_exact(h)

    # Partial down-projection accumulated in f32: (tm, th) @ (th, D).
    acc_ref[...] += jnp.dot(h.astype(w_down_ref.dtype), w_down_ref[...],
                            preferred_element_type=jnp.float32)

    @pl.when(k == pl.num_programs(1) - 1)
    def _():
        o_ref[...] = (acc_ref[...] + b_down_ref[...].astype(jnp.float32)).astype(o_ref.dtype)


def _vmem_budget_bytes():
    """~75% of this generation's physical VMEM (96 MiB v5e/v6e, 48 MiB v7x)."""
    cap = None
    try:
        info = pltpu.get_tpu_info()
        for name in ("vmem_capacity_bytes", "vmem_size_bytes", "vmem_bytes"):
            v = getattr(info, name, None)
            if v:
                cap = int(v)
                break
    except Exception:
        cap = None
    if not cap or cap <= 0:
        cap = 64 * 1024 * 1024  # conservative (v7x-sized) fallback
    return int(cap) * 3 // 4


def replit_gpt_mlp(x, w_up, b_up, w_down, b_down, *, tm=512, th=1024):
    """x: (batch, seq, d_model) -> (batch, seq, d_model)."""
    batch, seq, d_model = x.shape
    hidden = w_up.shape[1]
    M = batch * seq

    # ---- token tile: multiple of 256 for large M (full MXU rows), else cover M ------
    if M >= 256:
        tm = min(int(tm), pl.cdiv(M, 256) * 256)
        tm = max(256, (tm // 256) * 256)
    else:
        tm = pl.cdiv(M, 8) * 8  # single small tile, sublane-aligned

    # ---- hidden tile: largest lane-dense candidate that divides H -------------------
    for cand in (int(th), 1024, 512, 384, 256, 128):
        if 0 < cand <= hidden and hidden % cand == 0:
            th = cand
            break
    else:
        th = hidden

    # ---- fit tiles to the per-generation VMEM budget --------------------------------
    budget = _vmem_budget_bytes()
    x_isz = x.dtype.itemsize
    w_isz = w_up.dtype.itemsize
    single_io = False  # single-buffer the H-invariant x / out / b_down blocks

    def vmem_est():
        io_bufs = 1 if single_io else 2
        x_tile = tm * d_model * x_isz
        out_tile = tm * d_model * x_isz
        wup = d_model * th * w_isz
        wdn = th * d_model * w_isz
        bias = 8 * th * w_isz + 8 * d_model * w_isz
        acc = tm * d_model * 4
        return io_bufs * (x_tile + out_tile) + 2 * (wup + wdn + bias) + acc

    if vmem_est() > budget:
        single_io = True
    while vmem_est() > budget:
        if th >= 256 and th % 2 == 0 and hidden % (th // 2) == 0:
            th //= 2
        elif tm > 256:
            tm = max(256, (tm // 2 // 8) * 8)
        elif tm > 8:
            tm = max(8, (tm // 2 // 8) * 8)
        else:
            break

    M_pad = pl.cdiv(M, tm) * tm

    x2 = x.reshape(M, d_model)
    if M_pad != M:
        x2 = jnp.pad(x2, ((0, M_pad - M), (0, 0)))
    b_up2 = b_up.reshape(1, hidden)
    b_down2 = b_down.reshape(1, d_model)

    # TODO(synk): for single-M-tile (decode) shapes on v7x, add a second "parallel"
    # grid axis over the output d_model columns so both TensorCores are used.
    grid = (M_pad // tm, hidden // th)

    def io_spec(shape, index_map):
        # H-invariant blocks only need one VMEM buffer when VMEM is tight.
        if single_io:
            try:
                return pl.BlockSpec(shape, index_map, pipeline_mode=pl.Buffered(1))
            except Exception:  # older jax without pipeline_mode / Buffered
                pass
        return pl.BlockSpec(shape, index_map)

    # Weights are re-streamed once per M tile (H is the inner, "arbitrary" axis).
    cost = pl.CostEstimate(
        flops=4 * M_pad * d_model * hidden,
        transcendentals=M_pad * hidden,
        bytes_accessed=(2 * M_pad * d_model * x_isz
                        + grid[0] * (int(w_up.size) + int(w_down.size)) * w_isz
                        + (int(b_up.size) + int(b_down.size)) * w_isz),
    )

    out = pl.pallas_call(
        mlp_kernel,
        out_shape=jax.ShapeDtypeStruct((M_pad, d_model), x.dtype),
        grid_spec=pltpu.PrefetchScalarGridSpec(
            num_scalar_prefetch=0,
            grid=grid,
            in_specs=[
                io_spec((tm, d_model), lambda i, k: (i, 0)),          # x tile (H-invariant)
                pl.BlockSpec((d_model, th), lambda i, k: (0, k)),     # W_up slab (streamed)
                pl.BlockSpec((1, th), lambda i, k: (0, k)),           # b_up slab
                pl.BlockSpec((th, d_model), lambda i, k: (k, 0)),     # W_down slab (streamed)
                io_spec((1, d_model), lambda i, k: (0, 0)),           # b_down (H-invariant)
            ],
            out_specs=io_spec((tm, d_model), lambda i, k: (i, 0)),
            scratch_shapes=[pltpu.VMEM((tm, d_model), jnp.float32)],
        ),
        compiler_params=pltpu.CompilerParams(
            dimension_semantics=("parallel", "arbitrary"),
            vmem_limit_bytes=int(budget),
        ),
        cost_estimate=cost,
    )(x2, w_up, b_up2, w_down, b_down2)

    if M_pad != M:
        out = out[:M]
    return out.reshape(batch, seq, d_model)


def init_params(key, d_model, mlp_ratio, dtype=jnp.float32):
    """Deterministic init mimicking torch.nn.Linear (U(-1/sqrt(fan_in), 1/sqrt(fan_in))).

    Weights are returned as (in_features, out_features) to match the kernel layout.
    """
    hidden = mlp_ratio * d_model
    k1, k2, k3, k4 = jax.random.split(key, 4)
    bound_up = 1.0 / jnp.sqrt(float(d_model))
    bound_down = 1.0 / jnp.sqrt(float(hidden))
    w_up = jax.random.uniform(k1, (d_model, hidden), dtype, -bound_up, bound_up)
    b_up = jax.random.uniform(k2, (hidden,), dtype, -bound_up, bound_up)
    w_down = jax.random.uniform(k3, (hidden, d_model), dtype, -bound_down, bound_down)
    b_down = jax.random.uniform(k4, (d_model,), dtype, -bound_down, bound_down)
    return w_up, b_up, w_down, b_down


def _reference(x, w_up, b_up, w_down, b_down):
    h = jax.nn.gelu(x @ w_up + b_up, approximate=False)  # exact GELU (torch approximate='none')
    return h @ w_down + b_down


if __name__ == "__main__":
    key = jax.random.PRNGKey(0)

    # Case 1: tiny f32 shapes consistent with the module (single grid step).
    kx, kp, key = jax.random.split(key, 3)
    x = jax.random.normal(kx, (2, 8, 32), jnp.float32)
    params = init_params(kp, 32, 4, jnp.float32)
    y = replit_gpt_mlp(x, *params)
    jax.block_until_ready(y)
    assert jnp.allclose(y, _reference(x, *params), atol=2e-4, rtol=2e-4), "case 1 mismatch"

    # Case 2: small M (padding path) with two H-reduction steps (hidden=1024, th=512).
    kx2, kp2, key = jax.random.split(key, 3)
    x2 = jax.random.normal(kx2, (2, 20, 256), jnp.float32)
    params2 = init_params(kp2, 256, 4, jnp.float32)
    y2 = replit_gpt_mlp(x2, *params2, th=512)
    jax.block_until_ready(y2)
    assert jnp.allclose(y2, _reference(x2, *params2), atol=2e-4, rtol=2e-4), "case 2 mismatch"

    # Case 3: bf16 weights/activations, multiple token tiles + M padding (M=320, tm=256).
    kx3, kp3 = jax.random.split(key)
    x3 = jax.random.normal(kx3, (2, 160, 256), jnp.bfloat16)
    params3 = init_params(kp3, 256, 4, jnp.bfloat16)
    y3 = replit_gpt_mlp(x3, *params3, tm=256)
    jax.block_until_ready(y3)
    ref3 = _reference(x3.astype(jnp.float32),
                      *[p.astype(jnp.float32) for p in params3])
    assert jnp.allclose(y3.astype(jnp.float32), ref3, atol=3e-2, rtol=3e-2), "case 3 mismatch"

    print("KERNEL_OK")
</pallas_src>

<mosaic_0001>
module attributes {stable_mosaic.version = 11 : i64} {
  func.func @mlp_kernel(%arg0: i32, %arg1: i32, %arg2: memref<16x32xf32, #tpu.memory_space<vmem>>, %arg3: memref<32x128xf32, #tpu.memory_space<vmem>>, %arg4: memref<1x128xf32, #tpu.memory_space<vmem>>, %arg5: memref<128x32xf32, #tpu.memory_space<vmem>>, %arg6: memref<1x32xf32, #tpu.memory_space<vmem>>, %arg7: memref<16x32xf32, #tpu.memory_space<vmem>>, %arg8: memref<16x32xf32, #tpu.memory_space<vmem>>) attributes {dimension_semantics = [#tpu.dimension_semantics<parallel>, #tpu.dimension_semantics<arbitrary>], iteration_bounds = array<i64: 1, 1>, scalar_prefetch = 0 : i64, scratch_operands = 1 : i64, tpu.core_type = #tpu.core_type<tc>, window_params = [{transform_indices = @transform_0, window_bounds = array<i64: 16, 32>}, {transform_indices = @transform_1, window_bounds = array<i64: 32, 128>}, {transform_indices = @transform_2, window_bounds = array<i64: 1, 128>}, {transform_indices = @transform_3, window_bounds = array<i64: 128, 32>}, {pipeline_mode = #tpu.pipeline_mode<synchronous>, transform_indices = @transform_4, window_bounds = array<i64: 1, 32>}, {transform_indices = @transform_5, window_bounds = array<i64: 16, 32>}]} {
    %c0_i32 = arith.constant 0 : i32
    %0 = arith.cmpi eq, %arg1, %c0_i32 : i32
    %1 = arith.extui %0 : i1 to i32
    %c0_i32_0 = arith.constant 0 : i32
    %2 = arith.cmpi ne, %1, %c0_i32_0 : i32
    scf.if %2 {
      %cst_18 = arith.constant 0.000000e+00 : f32
      %25 = vector.broadcast %cst_18 : f32 to vector<16x32xf32>
      %c0_19 = arith.constant 0 : index
      %c0_20 = arith.constant 0 : index
      %26 = vector.load %arg8[%c0_19, %c0_20] : memref<16x32xf32, #tpu.memory_space<vmem>>, vector<16x32xf32>
      tpu.vector_store %arg8[%c0_19, %c0_20], %25 {strides = array<i32>} : memref<16x32xf32, #tpu.memory_space<vmem>>, vector<16x32xf32>,
    } else {
    }
    %c0 = arith.constant 0 : index
    %c0_1 = arith.constant 0 : index
    %3 = vector.load %arg2[%c0, %c0_1] : memref<16x32xf32, #tpu.memory_space<vmem>>, vector<16x32xf32>
    %c0_2 = arith.constant 0 : index
    %c0_3 = arith.constant 0 : index
    %4 = vector.load %arg3[%c0_2, %c0_3] : memref<32x128xf32, #tpu.memory_space<vmem>>, vector<32x128xf32>
    %cst = arith.constant dense<0.000000e+00> : vector<16x128xf32>
    %5 = tpu.matmul %3, %4, %cst {dimension_numbers = #tpu.dot_dimension_numbers<[1], [0], [0], [1], [0, 0, 1, 1], [], []>} : vector<16x32xf32>, vector<32x128xf32>, vector<16x128xf32> -> vector<16x128xf32>
    %c0_4 = arith.constant 0 : index
    %c0_5 = arith.constant 0 : index
    %6 = vector.load %arg4[%c0_4, %c0_5] : memref<1x128xf32, #tpu.memory_space<vmem>>, vector<1x128xf32>
    %7 = vector.broadcast %6 : vector<1x128xf32> to vector<16x128xf32>
    %8 = arith.addf %5, %7 : vector<16x128xf32>
    %cst_6 = arith.constant 5.000000e-01 : f32
    %9 = vector.broadcast %cst_6 : f32 to vector<16x128xf32>
    %10 = arith.mulf %9, %8 : vector<16x128xf32>
    %cst_7 = arith.constant 0.707106769 : f32
    %11 = vector.broadcast %cst_7 : f32 to vector<16x128xf32>
    %12 = arith.mulf %8, %11 : vector<16x128xf32>
    %13 = math.erf %12 : vector<16x128xf32>
    %cst_8 = arith.constant 1.000000e+00 : f32
    %14 = vector.broadcast %cst_8 : f32 to vector<16x128xf32>
    %15 = arith.addf %14, %13 : vector<16x128xf32>
    %16 = arith.mulf %10, %15 : vector<16x128xf32>
    %c0_9 = arith.constant 0 : index
    %c0_10 = arith.constant 0 : index
    %17 = vector.load %arg8[%c0_9, %c0_10] : memref<16x32xf32, #tpu.memory_space<vmem>>, vector<16x32xf32>
    %c0_11 = arith.constant 0 : index
    %c0_12 = arith.constant 0 : index
    %18 = vector.load %arg5[%c0_11, %c0_12] : memref<128x32xf32, #tpu.memory_space<vmem>>, vector<128x32xf32>
    %cst_13 = arith.constant dense<0.000000e+00> : vector<16x32xf32>
    %19 = tpu.matmul %16, %18, %cst_13 {dimension_numbers = #tpu.dot_dimension_numbers<[1], [0], [0], [1], [0, 0, 1, 1], [], []>} : vector<16x128xf32>, vector<128x32xf32>, vector<16x32xf32> -> vector<16x32xf32>
    %20 = arith.addf %17, %19 : vector<16x32xf32>
    %c0_14 = arith.constant 0 : index
    %c0_15 = arith.constant 0 : index
    %21 = vector.load %arg8[%c0_14, %c0_15] : memref<16x32xf32, #tpu.memory_space<vmem>>, vector<16x32xf32>
    tpu.vector_store %arg8[%c0_14, %c0_15], %20 {strides = array<i32>} : memref<16x32xf32, #tpu.memory_space<vmem>>, vector<16x32xf32>,
    %c0_i32_16 = arith.constant 0 : i32
    %22 = arith.cmpi eq, %arg1, %c0_i32_16 : i32
    %23 = arith.extui %22 : i1 to i32
    %c0_i32_17 = arith.constant 0 : i32
    %24 = arith.cmpi ne, %23, %c0_i32_17 : i32
    scf.if %24 {
      %c0_18 = arith.constant 0 : index
      %c0_19 = arith.constant 0 : index
      %25 = vector.load %arg8[%c0_18, %c0_19] : memref<16x32xf32, #tpu.memory_space<vmem>>, vector<16x32xf32>
      %c0_20 = arith.constant 0 : index
      %c0_21 = arith.constant 0 : index
      %26 = vector.load %arg6[%c0_20, %c0_21] : memref<1x32xf32, #tpu.memory_space<vmem>>, vector<1x32xf32>
      %27 = vector.broadcast %26 : vector<1x32xf32> to vector<16x32xf32>
      %28 = arith.addf %25, %27 : vector<16x32xf32>
      %c0_22 = arith.constant 0 : index
      %c0_23 = arith.constant 0 : index
      %29 = vector.load %arg7[%c0_22, %c0_23] : memref<16x32xf32, #tpu.memory_space<vmem>>, vector<16x32xf32>
      tpu.vector_store %arg7[%c0_22, %c0_23], %28 {strides = array<i32>} : memref<16x32xf32, #tpu.memory_space<vmem>>, vector<16x32xf32>,
    } else {
    }
    return
  }
  func.func @transform_0(%arg0: i32, %arg1: i32) -> (i32, i32) {
    %c0_i32 = arith.constant 0 : i32
    %c0_i32_0 = arith.constant 0 : i32
    return %arg0, %c0_i32 : i32, i32
  }
  func.func @transform_1(%arg0: i32, %arg1: i32) -> (i32, i32) {
    %c0_i32 = arith.constant 0 : i32
    %c0_i32_0 = arith.constant 0 : i32
    return %c0_i32, %arg1 : i32, i32
  }
  func.func @transform_2(%arg0: i32, %arg1: i32) -> (i32, i32) {
    %c0_i32 = arith.constant 0 : i32
    %c0_i32_0 = arith.constant 0 : i32
    return %c0_i32, %arg1 : i32, i32
  }
  func.func @transform_3(%arg0: i32, %arg1: i32) -> (i32, i32) {
    %c0_i32 = arith.constant 0 : i32
    %c0_i32_0 = arith.constant 0 : i32
    return %arg1, %c0_i32 : i32, i32
  }
  func.func @transform_4(%arg0: i32, %arg1: i32) -> (i32, i32) {
    %c0_i32 = arith.constant 0 : i32
    %c0_i32_0 = arith.constant 0 : i32
    %c0_i32_1 = arith.constant 0 : i32
    return %c0_i32, %c0_i32_0 : i32, i32
  }
  func.func @transform_5(%arg0: i32, %arg1: i32) -> (i32, i32) {
    %c0_i32 = arith.constant 0 : i32
    %c0_i32_0 = arith.constant 0 : i32
    return %arg0, %c0_i32 : i32, i32
  }
}

</mosaic_0001>

<llo_original>
// kernel: tpu_custom_call.1
$region0: #{tpu_custom_call.1}
  #allocation0 [shape = 'u32[]', space=smem, size = 0x4, offset = 0x4, fixed_abs, tag = 'smem constant byte address 0x4 - core index']
  #allocation1 [shape = 'u32[144,128]{1,0:T(1,128)}', space=vmem, size = 0x12000, scoped, tag = 'internal scratch']
  #allocation2 [shape = 'f32[16,32]{1,0:T(8,128)}', space=vmem, size = 0x2000, scoped, tag = 'scratch operand']
  %s0 = inlined_call_operand.vmem [shape: f32[16,32], index: 0, kind: input, shape index: {}]
  %s1 = inlined_call_operand.vmem [shape: f32[32,128], index: 1, kind: input, shape index: {}]
  %s2 = inlined_call_operand.vmem [shape: f32[1,128], index: 2, kind: input, shape index: {}]
  %s3 = inlined_call_operand.vmem [shape: f32[128,32], index: 3, kind: input, shape index: {}]
  %s4 = inlined_call_operand.vmem [shape: f32[1,32], index: 4, kind: input, shape index: {}]
  %s5 = inlined_call_operand.hbm [shape: f32[16,32], index: 5, kind: output, shape index: {}]
  %s6 = sld [smem:[#allocation0]]
  $region38: #{tpu_custom_call.1} parent=0
    _
  %s8 = ssub.s32 1, %s6
  %s9 = scalar_select 0, %s8, %s6
  $region1: #{tpu_custom_call.1} parent=0
    #allocation3 [shape = 'u8[8192]{0}', space=vmem, size = 0x2000, scoped, tag = 'output window, operand 0, single buffered']
    #allocation4 [shape = 's32[1]{0}', space=sflag, size = 0x4, scoped, tag = 'scoped memory for tpu_custom_call.1']
    %10 = vsyncpa [#allocation4], 0
    // Predicated region
    $region2: #{tpu_custom_call.1} parent=1 // pred_check
      _
    $region3: #{tpu_custom_call.1} parent=1 // pred_check_branch
      %12 = sbr.rel (0) target = $region5
    $region4: #{tpu_custom_call.1} parent=1 // pred_region
      _
    $region5: #{tpu_custom_call.1} parent=1 // pred_fallthru
      _
    // Predicated region
    $region6: #{tpu_custom_call.1} parent=1 // pred_check
      _
    $region7: #{tpu_custom_call.1} parent=1 // pred_check_branch
      %14 = sbr.rel (0) target = $region9
    $region8: #{tpu_custom_call.1} parent=1 // pred_region
      _
    $region9: #{tpu_custom_call.1} parent=1 // pred_fallthru
      _
    // Predicated region
    $region10: #{tpu_custom_call.1} parent=1 // pred_check
      _
    $region11: #{tpu_custom_call.1} parent=1 // pred_check_branch
      %16 = sbr.rel (0) target = $region13
    $region12: #{tpu_custom_call.1} parent=1 // pred_region
      _
    $region13: #{tpu_custom_call.1} parent=1 // pred_fallthru
      _
    // Predicated region
    $region14: #{tpu_custom_call.1} parent=1 // pred_check
      _
    $region15: #{tpu_custom_call.1} parent=1 // pred_check_branch
      %18 = sbr.rel (0) target = $region17
    $region16: #{tpu_custom_call.1} parent=1 // pred_region
      _
    $region17: #{tpu_custom_call.1} parent=1 // pred_fallthru
      _
    // Predicated region
    $region18: #{tpu_custom_call.1} parent=1 // pred_check
      _
    $region19: #{tpu_custom_call.1} parent=1 // pred_check_branch
      %20 = sbr.rel (0) target = $region21
    $region20: #{tpu_custom_call.1} parent=1 // pred_region
      _
    $region21: #{tpu_custom_call.1} parent=1 // pred_fallthru
      _
    %p21 = scmp.eq.s32.totalorder 0, 0
    // Predicated region
    $region22: #{tpu_custom_call.1} parent=1 // pred_check
      %p22 = pneg %p21
    $region23: #{tpu_custom_call.1} parent=1 // pred_check_branch
      %24 = sbr.rel (%p22) target = $region25
    $region24: #{tpu_custom_call.1} parent=1 // pred_region
      %vm25 = vcmask 261120
      %26 = vst.msk [vmem:[#allocation2] sm:$0xff] %vm25, 0.0
      %27 = vst.msk [vmem:[#allocation2 + $0x8] sm:$0xff] %vm25, 0.0
    $region25: #{tpu_custom_call.1} parent=1 // pred_fallthru
      _
    %v28 = vld [vmem:[%s0] sm:$0xff]
    %v29 = vld [vmem:[%s0 + $0x8] sm:$0xff]
    %v30 = vld [vmem:[%s1] sm:$0xff]
    %v31 = vld [vmem:[%s1 + $0x8] sm:$0xff]
    %v32 = vld [vmem:[%s1 + $0x10] sm:$0xff]
    %v33 = vld [vmem:[%s1 + $0x18] sm:$0xff]
    %v34 = vld [vmem:[%s2] sm:$0x1]
    %v36 = vlaneseq
    %v37 = vshrl.u32 %v36, 7
    %v38 = vsub.s32 0, %v37
    %v39 = vrot.slane %v34, %v38
    %vm41 = vcmask 261120
    %v43 = vsel %vm41, %v28, 0
    %v46 = vsel %vm41, %v29, 0
    %48 = vmatprep.subr.mxu0 0.0
    %49 = vmatpush1.msra.mxu0 %v30
    %50 = vmatprep.subr.mxu0 0.0
    %51 = vmatpush1.msra.mxu0 %v31
    %52 = vmatprep.subr.mxu0 0.0
    %53 = vmatpush1.msra.mxu0 %v32
    %54 = vmatprep.subr.mxu0 0.0
    %55 = vmatpush1.msra.mxu0 %v33
    %56 = vmatprep.subr.mxu0 0.0
    %57 = vmatpush1.msra.mxu0 0.0
    %58 = vmatprep.subr.mxu0 0.0
    %59 = vmatpush1.msra.mxu0 0.0
    %60 = vmatprep.subr.mxu0 0.0
    %61 = vmatpush1.msra.mxu0 0.0
    %62 = vmatprep.subr.mxu0 0.0
    %63 = vmatpush1.msra.mxu0 0.0
    %64 = vmatprep.subr.mxu0 0.0
    %65 = vmatpush1.msra.mxu0 0.0
    %66 = vmatprep.subr.mxu0 0.0
    %67 = vmatpush1.msra.mxu0 0.0
    %68 = vmatprep.subr.mxu0 0.0
    %69 = vmatpush1.msra.mxu0 0.0
    %70 = vmatprep.subr.mxu0 0.0
    %71 = vmatpush1.msra.mxu0 0.0
    %72 = vmatprep.subr.mxu0 0.0
    %73 = vmatpush1.msra.mxu0 0.0
    %74 = vmatprep.subr.mxu0 0.0
    %75 = vmatpush1.msra.mxu0 0.0
    %76 = vmatprep.subr.mxu0 0.0
    %77 = vmatpush1.msra.mxu0 0.0
    %78 = vmatprep.subr.mxu0 0.0
    %79 = vmatpush1.msra.mxu0 0.0
    %80 = vmatprep.subr.mxu0 0.0
    %81 = vmatpush1.msra.mxu0 0.0
    %82 = vmatprep.subr.mxu0 0.0
    %83 = vmatpush1.msra.mxu0 0.0
    %84 = vmatprep.subr.mxu0 0.0
    %85 = vmatpush1.msra.mxu0 0.0
    %86 = vmatprep.subr.mxu0 0.0
    %87 = vmatpush1.msra.mxu0 0.0
    %88 = vmatprep.subr.mxu0 0.0
    %89 = vmatpush1.msra.mxu0 0.0
    %90 = vmatprep.subr.mxu0 0.0
    %91 = vmatpush1.msra.mxu0 0.0
    %92 = vmatprep.subr.mxu0 0.0
    %93 = vmatpush1.msra.mxu0 0.0
    %94 = vmatprep.subr.mxu0 0.0
    %95 = vmatpush1.msra.mxu0 0.0
    %96 = vmatprep.subr.mxu0 0.0
    %97 = vmatpush1.msra.mxu0 0.0
    %98 = vmatprep.subr.mxu0 0.0
    %99 = vmatpush1.msra.mxu0 0.0
    %100 = vmatprep.subr.mxu0 0.0
    %101 = vmatpush1.msra.mxu0 0.0
    %102 = vmatprep.subr.mxu0 0.0
    %103 = vmatpush1.msra.mxu0 0.0
    %104 = vmatprep.subr.mxu0 0.0
    %105 = vmatpush1.msra.mxu0 0.0
    %106 = vmatprep.subr.mxu0 0.0
    %107 = vmatpush1.msra.mxu0 0.0
    %108 = vmatprep.subr.mxu0 0.0
    %109 = vmatpush1.msra.mxu0 0.0
    %110 = vmatprep.subr.mxu0 0.0
    %111 = vmatpush1.msra.mxu0 0.0
    %112 = vmatprep.mubr.f32.mxu0 0.0
    %113 = vmatmul.mubr.f32.gmra.mrb[0].mxu0 %v43
    %v114 = vpop.f32.mrb[0].mxu0
    %v115 = vadd.f32 %v39, %v114
    %v116 = vpop.f32.mrb[0].mxu0
    %117 = vmatprep.mubr.f32.mxu0 0.0
    %118 = vmatmul.mubr.f32.gmra.mrb[0].mxu0 %v46
    %v119 = vpop.f32.mrb[0].mxu0
    %v120 = vadd.f32 %v39, %v119
    %v121 = vpop.f32.mrb[0].mxu0
    %122 = vdwg.mxu0
    %v123 = vmul.f32 %v115, 0.5
    %v124 = vmul.f32 %v120, 0.5
    %v125 = vmul.f32 %v115, 0.70710677
    %v126 = vmul.f32 %v120, 0.70710677
    %v127 = verf.f32.pop %v125
    %v128 = verf.f32.pop %v126
    %v129 = vadd.f32 %v127, 1.0
    %v130 = vadd.f32 %v128, 1.0
    %v131 = vmul.f32 %v123, %v129
    %v132 = vmul.f32 %v124, %v130
    %v133 = vld [vmem:[#allocation2] sm:$0xff]
    %v134 = vld [vmem:[#allocation2 + $0x8] sm:$0xff]
    %v135 = vld [vmem:[%s3] sm:$0xff]
    %v136 = vld [vmem:[%s3 + $0x8] sm:$0xff]
    %v137 = vld [vmem:[%s3 + $0x10] sm:$0xff]
    %v138 = vld [vmem:[%s3 + $0x18] sm:$0xff]
    %v139 = vld [vmem:[%s3 + $0x20] sm:$0xff]
    %v140 = vld [vmem:[%s3 + $0x28] sm:$0xff]
    %v141 = vld [vmem:[%s3 + $0x30] sm:$0xff]
    %v142 = vld [vmem:[%s3 + $0x38] sm:$0xff]
    %v143 = vld [vmem:[%s3 + $0x40] sm:$0xff]
    %v144 = vld [vmem:[%s3 + $0x48] sm:$0xff]
    %v145 = vld [vmem:[%s3 + $0x50] sm:$0xff]
    %v146 = vld [vmem:[%s3 + $0x58] sm:$0xff]
    %v147 = vld [vmem:[%s3 + $0x60] sm:$0xff]
    %v148 = vld [vmem:[%s3 + $0x68] sm:$0xff]
    %v149 = vld [vmem:[%s3 + $0x70] sm:$0xff]
    %v150 = vld [vmem:[%s3 + $0x78] sm:$0xff]
    %151 = vmatprep.subr.mxu0 0.0
    %152 = vmatpush1.msra.mxu0 %v135
    %153 = vmatprep.subr.mxu0 0.0
    %154 = vmatpush1.msra.mxu0 %v136
    %155 = vmatprep.subr.mxu0 0.0
    %156 = vmatpush1.msra.mxu0 %v137
    %157 = vmatprep.subr.mxu0 0.0
    %158 = vmatpush1.msra.mxu0 %v138
    %159 = vmatprep.subr.mxu0 0.0
    %160 = vmatpush1.msra.mxu0 %v139
    %161 = vmatprep.subr.mxu0 0.0
    %162 = vmatpush1.msra.mxu0 %v140
    %163 = vmatprep.subr.mxu0 0.0
    %164 = vmatpush1.msra.mxu0 %v141
    %165 = vmatprep.subr.mxu0 0.0
    %166 = vmatpush1.msra.mxu0 %v142
    %167 = vmatprep.subr.mxu0 0.0
    %168 = vmatpush1.msra.mxu0 %v143
    %169 = vmatprep.subr.mxu0 0.0
    %170 = vmatpush1.msra.mxu0 %v144
    %171 = vmatprep.subr.mxu0 0.0
    %172 = vmatpush1.msra.mxu0 %v145
    %173 = vmatprep.subr.mxu0 0.0
    %174 = vmatpush1.msra.mxu0 %v146
    %175 = vmatprep.subr.mxu0 0.0
    %176 = vmatpush1.msra.mxu0 %v147
    %177 = vmatprep.subr.mxu0 0.0
    %178 = vmatpush1.msra.mxu0 %v148
    %179 = vmatprep.subr.mxu0 0.0
    %180 = vmatpush1.msra.mxu0 %v149
    %181 = vmatprep.subr.mxu0 0.0
    %182 = vmatpush1.msra.mxu0 %v150
    %183 = vmatprep.subr.mxu0 0.0
    %184 = vmatpush1.msra.mxu0 0.0
    %185 = vmatprep.subr.mxu0 0.0
    %186 = vmatpush1.msra.mxu0 0.0
    %187 = vmatprep.subr.mxu0 0.0
    %188 = vmatpush1.msra.mxu0 0.0
    %189 = vmatprep.subr.mxu0 0.0
    %190 = vmatpush1.msra.mxu0 0.0
    %191 = vmatprep.subr.mxu0 0.0
    %192 = vmatpush1.msra.mxu0 0.0
    %193 = vmatprep.subr.mxu0 0.0
    %194 = vmatpush1.msra.mxu0 0.0
    %195 = vmatprep.subr.mxu0 0.0
    %196 = vmatpush1.msra.mxu0 0.0
    %197 = vmatprep.subr.mxu0 0.0
    %198 = vmatpush1.msra.mxu0 0.0
    %199 = vmatprep.subr.mxu0 0.0
    %200 = vmatpush1.msra.mxu0 0.0
    %201 = vmatprep.subr.mxu0 0.0
    %202 = vmatpush1.msra.mxu0 0.0
    %203 = vmatprep.subr.mxu0 0.0
    %204 = vmatpush1.msra.mxu0 0.0
    %205 = vmatprep.subr.mxu0 0.0
    %206 = vmatpush1.msra.mxu0 0.0
    %207 = vmatprep.subr.mxu0 0.0
    %208 = vmatpush1.msra.mxu0 0.0
    %209 = vmatprep.subr.mxu0 0.0
    %210 = vmatpush1.msra.mxu0 0.0
    %211 = vmatprep.subr.mxu0 0.0
    %212 = vmatpush1.msra.mxu0 0.0
    %213 = vmatprep.subr.mxu0 0.0
    %214 = vmatpush1.msra.mxu0 0.0
    %215 = vmatprep.mubr.f32.mxu0 0.0
    %216 = vmatmul.mubr.f32.gmra.mrb[0].mxu0 %v131
    %v217 = vpop.f32.mrb[0].mxu0
    %v218 = vadd.f32 0.0, %v217
    %v219 = vpop.f32.mrb[0].mxu0
    %220 = vmatprep.mubr.f32.mxu0 0.0
    %221 = vmatmul.mubr.f32.gmra.mrb[0].mxu0 %v132
    %v222 = vpop.f32.mrb[0].mxu0
    %v223 = vadd.f32 0.0, %v222
    %v224 = vpop.f32.mrb[0].mxu0
    %225 = vdwg.mxu0
    %v226 = vadd.f32 %v133, %v218
    %v227 = vadd.f32 %v134, %v223
    %228 = vst.msk [vmem:[#allocation2] sm:$0xff] %vm41, %v226
    %229 = vst.msk [vmem:[#allocation2 + $0x8] sm:$0xff] %vm41, %v227
    // Predicated region
    $region26: #{tpu_custom_call.1} parent=1 // pred_check
      %p230 = pneg %p21
    $region27: #{tpu_custom_call.1} parent=1 // pred_check_branch
      %232 = sbr.rel (%p230) target = $region29
    $region28: #{tpu_custom_call.1} parent=1 // pred_region
      %v233 = vld [vmem:[#allocation2] sm:$0xff]
      %v234 = vld [vmem:[#allocation2 + $0x8] sm:$0xff]
      %v235 = vld [vmem:[%s4] sm:$0x1]
      %v237 = vlaneseq
      %v238 = vshrl.u32 %v237, 7
      %v239 = vsub.s32 0, %v238
      %v240 = vrot.slane %v235, %v239
      %v242 = vadd.f32 %v233, %v240
      %v243 = vadd.f32 %v234, %v240
      %244 = vst.msk [vmem:[#allocation3] sm:$0xff] %vm41, %v242
      %245 = vst.msk [vmem:[#allocation3 + $0x8] sm:$0xff] %vm41, %v243
    $region29: #{tpu_custom_call.1} parent=1 // pred_fallthru
      _
    // Predicated region
    $region30: #{tpu_custom_call.1} parent=1 // pred_check
      _
    $region31: #{tpu_custom_call.1} parent=1 // pred_check_branch
      %247 = sbr.rel (0) target = $region33
    $region32: #{tpu_custom_call.1} parent=1 // pred_region
      %s249 = ssub.s32 256, 256
      %250 = vsyncadd [#allocation4], %s249
      %s251 = sshll.u32 [#allocation3], 4
      %s252 = int_to_ptr.vmem [resolvable:$true] %s251
      %257 = dma.vmem_to_hbm [thread:$0]  %s252, 256, %s5, [#allocation4], 128, 128, 8
    $region33: #{tpu_custom_call.1} parent=1 // pred_fallthru
      _
    // Predicated region
    $region34: #{tpu_custom_call.1} parent=1 // pred_check
      _
    $region35: #{tpu_custom_call.1} parent=1 // pred_check_branch
      %259 = sbr.rel (0) target = $region37
    $region36: #{tpu_custom_call.1} parent=1 // pred_region
      %260 = dma.done [#allocation4], 256
    $region37: #{tpu_custom_call.1} parent=1 // pred_fallthru
      _
    %261 = vsyncpa [#allocation4], 1

</llo_original>
